<compile_context>
chip_gen: v7x
topology: tpu7x:2x2x1
jax: 0.10.0
libtpu: 0.0.40
codegen_flags: <defaults>
</compile_context>

<pallas_src>
from functools import partial

import numpy as np
import jax
import jax.numpy as jnp
from jax.experimental import pallas as pl
from jax.experimental.pallas import tpu as pltpu


def _round_up(x, m):
    return ((x + m - 1) // m) * m


def _make_cost_kernel(w_span: float, w_giou: float, eps: float = 1e-6):
    def kernel(logits_ref, gather_ref, sp_ref, st_ref, cost_ref):
        # ---- class cost: softmax over the memory axis, then (-w_class)-scaled
        #      one-hot gather on the MXU:  (TN, M) @ (M, T_pad) -> (TN, T_pad)
        logits = logits_ref[...]                                       # (TN, M) f32
        mx = jnp.max(logits, axis=-1, keepdims=True)
        ex = jnp.exp(logits - mx)
        probs = ex / jnp.sum(ex, axis=-1, keepdims=True)
        cost = jnp.dot(probs, gather_ref[...],
                       preferred_element_type=jnp.float32)             # (TN, Tp)

        # ---- span L1 cost (cdist, p=1) + gIoU cost, broadcast (TN,1) x (1,Tp)
        ps = sp_ref[:, 0:1]                                            # (TN, 1)
        pe = sp_ref[:, 1:2]
        ts = st_ref[0:1, :]                                            # (1, Tp)
        te = st_ref[1:2, :]

        cost = cost + w_span * (jnp.abs(ps - ts) + jnp.abs(pe - te))

        inter = jnp.maximum(jnp.minimum(pe, te) - jnp.maximum(ps, ts), 0.0)
        union = (pe - ps) + (te - ts) - inter
        iou = inter / (union + eps)                                    # eps: no NaN/Inf
        enclose = jnp.maximum(pe, te) - jnp.minimum(ps, ts)
        giou = iou - (enclose - union) / (enclose + eps)

        cost_ref[...] = cost - w_giou * giou

    return kernel


@partial(jax.jit, static_argnames=("cost_class", "cost_span", "cost_giou"))
def compute_cost_matrix(logits, tgt_idx, span_pred, span_tgt, *,
                        cost_class=1.0, cost_span=1.0, cost_giou=1.0):
    """Pallas cost-matrix computation. Returns (B*Q, T) float32."""
    B, Q, M = logits.shape
    N = B * Q
    T = int(tgt_idx.shape[0])

    # Lane-dense target axis, sublane-aligned / tiled prediction axis.
    T_pad = _round_up(max(T, 1), 128)
    TILE_N = 256 if N >= 256 else _round_up(N, 8)
    N_pad = _round_up(N, TILE_N)

    f32 = jnp.float32
    logits_flat = jnp.zeros((N_pad, M), f32).at[:N].set(logits.reshape(N, M).astype(f32))
    sp = jnp.zeros((N_pad, 2), f32).at[:N].set(span_pred.reshape(N, 2).astype(f32))

    # (-cost_class)-scaled one-hot gather matrix (M, T_pad). Padded targets use index M
    # (out of range) -> all-zero column -> zero class cost there (sliced off below).
    tgt_pad = jnp.full((T_pad,), M, dtype=jnp.int32).at[:T].set(tgt_idx.astype(jnp.int32))
    gather_mat = (jnp.arange(M, dtype=jnp.int32)[:, None] == tgt_pad[None, :]).astype(f32)
    gather_mat = gather_mat * jnp.float32(-cost_class)

    st_src = span_tgt.astype(f32).reshape(T, 2)
    span_t = jnp.zeros((2, T_pad), f32)
    span_t = span_t.at[0, :T].set(st_src[:, 0])
    span_t = span_t.at[1, :T].set(st_src[:, 1])
    span_t = span_t.at[1, T:].set(1.0)        # padded targets = (0, 1): finite giou math

    kernel = _make_cost_kernel(float(cost_span), float(cost_giou))

    cost = pl.pallas_call(
        kernel,
        out_shape=jax.ShapeDtypeStruct((N_pad, T_pad), jnp.float32),
        grid_spec=pltpu.PrefetchScalarGridSpec(
            num_scalar_prefetch=0,
            grid=(N_pad // TILE_N,),
            in_specs=[
                pl.BlockSpec((TILE_N, M), lambda i: (i, 0)),     # logits tile
                pl.BlockSpec((M, T_pad), lambda i: (0, 0)),      # scaled one-hot, resident
                pl.BlockSpec((TILE_N, 2), lambda i: (i, 0)),     # packed pred spans
                pl.BlockSpec((2, T_pad), lambda i: (0, 0)),      # packed tgt spans, resident
            ],
            out_specs=pl.BlockSpec((TILE_N, T_pad), lambda i: (i, 0)),
        ),
        compiler_params=pltpu.CompilerParams(
            dimension_semantics=("parallel",)),                  # rows fully independent
    )(logits_flat, gather_mat, sp, span_t)

    return cost[:N, :T]


def _linear_sum_assignment_np(cost):
    """Exact rectangular min-cost assignment (Jonker-Volgenant augmenting paths).

    Returns (row_idx, col_idx) sorted by row_idx (same convention as
    scipy.optimize.linear_sum_assignment). Host-side, O(n^2 m).
    """
    cost = np.asarray(cost, dtype=np.float64)
    transposed = False
    if cost.shape[0] > cost.shape[1]:
        cost = cost.T
        transposed = True
    n, m = cost.shape                      # n <= m
    u = np.zeros(n + 1, dtype=np.float64)
    v = np.zeros(m + 1, dtype=np.float64)
    p = np.zeros(m + 1, dtype=np.int64)    # p[j] = row (1-based) assigned to col j; 0 = free
    way = np.zeros(m + 1, dtype=np.int64)
    for i in range(1, n + 1):
        p[0] = i
        j0 = 0
        minv = np.full(m + 1, np.inf)
        used = np.zeros(m + 1, dtype=bool)
        while True:
            used[j0] = True
            i0 = p[j0]
            free = ~used[1:]
            cur = cost[i0 - 1, :] - u[i0] - v[1:]
            better = free & (cur < minv[1:])
            minv[1:] = np.where(better, cur, minv[1:])
            way[1:][better] = j0
            masked = np.where(free, minv[1:], np.inf)
            j1 = int(np.argmin(masked)) + 1
            delta = masked[j1 - 1]
            u[p[used]] += delta
            v[used] -= delta
            minv[1:][free] -= delta
            j0 = j1
            if p[j0] == 0:
                break
        while j0 != 0:                     # augment along the alternating path
            j1 = way[j0]
            p[j0] = p[j1]
            j0 = j1
    cols = np.nonzero(p[1:])[0]
    rows = p[1:][cols] - 1
    if transposed:
        rows, cols = cols, rows
    order = np.argsort(rows)
    return rows[order].astype(np.int64), cols[order].astype(np.int64)


def hungarian_matcher(logits, tgt, span_pred, span_tgt,
                      cost_class=1.0, cost_span=1.0, cost_giou=1.0):
    """Replicates HungarianMatcher.forward.

    logits:    (B, Q, M) array
    tgt:       list[list[int]]                 (len B)
    span_pred: (B, Q, 2) array (post-sigmoid, (start, end))
    span_tgt:  list[list[tuple[float,float]]]  (len B)
    Returns list of (index_i, index_j) numpy-array pairs, one per batch element.
    """
    B, Q, _ = logits.shape
    sizes = [len(s) for s in span_tgt]
    total_t = sum(sizes)
    if total_t == 0:
        return [(np.zeros(0, np.int64), np.zeros(0, np.int64)) for _ in range(B)]

    tgt_flat = jnp.asarray([i for lst in tgt for i in lst], dtype=jnp.int32)
    span_tgt_flat = jnp.asarray([list(s) for lst in span_tgt for s in lst],
                                dtype=jnp.float32)

    cost = compute_cost_matrix(logits, tgt_flat, span_pred, span_tgt_flat,
                               cost_class=float(cost_class),
                               cost_span=float(cost_span),
                               cost_giou=float(cost_giou))
    cost_np = np.asarray(jax.block_until_ready(cost)).reshape(B, Q, total_t)

    # TODO(synk): linear_sum_assignment (combinatorial Hungarian optimization) has no
    # Pallas/TPU equivalent; it runs on host, matching the reference's .cpu() handoff.
    indices = []
    offset = 0
    for i, s in enumerate(sizes):
        c_i = cost_np[i][:, offset:offset + s]
        indices.append(_linear_sum_assignment_np(c_i))
        offset += s
    return indices


if __name__ == "__main__":
    key = jax.random.PRNGKey(0)
    k1, k2, k3 = jax.random.split(key, 3)

    B, Q, M = 2, 8, 32                      # batch, n_queries, memory size
    tgt = [[1, 5, 7], [0, 2, 3, 10, 31]]    # per-sample target diagram indices
    sizes = [len(t) for t in tgt]
    T = sum(sizes)

    logits = jax.random.normal(k1, (B, Q, M), dtype=jnp.float32)

    # span predictions "after sigmoid": uniform in (0,1), sorted so start <= end
    span_pred = jnp.sort(jax.random.uniform(k2, (B, Q, 2), dtype=jnp.float32), axis=-1)

    # target spans (start, end) in [0,1], start < end
    raw = np.array(jax.random.uniform(k3, (T, 2), dtype=jnp.float32))
    raw.sort(axis=-1)
    raw[:, 1] = np.minimum(raw[:, 1] + 1e-2, 1.0)   # guarantee nonzero length
    span_tgt, off = [], 0
    for s in sizes:
        span_tgt.append([(float(a), float(b)) for a, b in raw[off:off + s]])
        off += s

    # ---- kernel cost matrix vs. numpy reference of the torch forward math
    tgt_flat = jnp.asarray([i for lst in tgt for i in lst], dtype=jnp.int32)
    span_tgt_flat = jnp.asarray(raw, dtype=jnp.float32)
    cost_k = jax.block_until_ready(
        compute_cost_matrix(logits, tgt_flat, span_pred, span_tgt_flat,
                            cost_class=1.0, cost_span=1.0, cost_giou=1.0))
    cost_k = np.asarray(cost_k)

    lg = np.asarray(logits, dtype=np.float64).reshape(B * Q, M)
    pr = np.exp(lg - lg.max(-1, keepdims=True))
    pr /= pr.sum(-1, keepdims=True)
    cc = -pr[:, np.asarray([i for lst in tgt for i in lst])]
    sp = np.asarray(span_pred, dtype=np.float64).reshape(B * Q, 2)
    st = raw.astype(np.float64)
    l1 = np.abs(sp[:, None, 0] - st[None, :, 0]) + np.abs(sp[:, None, 1] - st[None, :, 1])
    inter = np.clip(np.minimum(sp[:, None, 1], st[None, :, 1])
                    - np.maximum(sp[:, None, 0], st[None, :, 0]), 0.0, None)
    union = (sp[:, 1] - sp[:, 0])[:, None] + (st[:, 1] - st[:, 0])[None, :] - inter
    enclose = (np.maximum(sp[:, None, 1], st[None, :, 1])
               - np.minimum(sp[:, None, 0], st[None, :, 0]))
    giou = inter / union - (enclose - union) / enclose
    cost_ref = cc + l1 - giou
    np.testing.assert_allclose(cost_k, cost_ref, rtol=1e-2, atol=1e-2)

    # ---- full forward (cost kernel + host assignment), structural checks
    indices = hungarian_matcher(logits, tgt, span_pred, span_tgt,
                                cost_class=1.0, cost_span=1.0, cost_giou=1.0)
    assert len(indices) == B
    for (ri, ci), s in zip(indices, sizes):
        assert len(ri) == len(ci) == min(Q, s)
        assert len(np.unique(ri)) == len(ri) and len(np.unique(ci)) == len(ci)

    print("KERNEL_OK")
</pallas_src>

<mosaic_0001>
module attributes {stable_mosaic.version = 11 : i64} {
  func.func @kernel(%arg0: i32, %arg1: memref<16x32xf32, #tpu.memory_space<vmem>>, %arg2: memref<32x128xf32, #tpu.memory_space<vmem>>, %arg3: memref<16x2xf32, #tpu.memory_space<vmem>>, %arg4: memref<2x128xf32, #tpu.memory_space<vmem>>, %arg5: memref<16x128xf32, #tpu.memory_space<vmem>>) attributes {dimension_semantics = [#tpu.dimension_semantics<parallel>], iteration_bounds = array<i64: 1>, scalar_prefetch = 0 : i64, scratch_operands = 0 : i64, tpu.core_type = #tpu.core_type<tc>, window_params = [{transform_indices = @transform_0, window_bounds = array<i64: 16, 32>}, {pipeline_mode = #tpu.pipeline_mode<synchronous>, transform_indices = @transform_1, window_bounds = array<i64: 32, 128>}, {transform_indices = @transform_2, window_bounds = array<i64: 16, 2>}, {pipeline_mode = #tpu.pipeline_mode<synchronous>, transform_indices = @transform_3, window_bounds = array<i64: 2, 128>}, {transform_indices = @transform_4, window_bounds = array<i64: 16, 128>}]} {
    %c0 = arith.constant 0 : index
    %c0_0 = arith.constant 0 : index
    %0 = vector.load %arg1[%c0, %c0_0] : memref<16x32xf32, #tpu.memory_space<vmem>>, vector<16x32xf32>
    %cst = arith.constant dense<0xFF800000> : vector<16xf32>
    %1 = vector.multi_reduction <maximumf>, %0, %cst [1] : vector<16x32xf32> to vector<16xf32>
    %2 = vector.shape_cast %1 : vector<16xf32> to vector<16x1xf32>
    %3 = vector.broadcast %2 : vector<16x1xf32> to vector<16x32xf32>
    %4 = arith.subf %0, %3 : vector<16x32xf32>
    %5 = math.exp %4 : vector<16x32xf32>
    %cst_1 = arith.constant dense<0.000000e+00> : vector<16xf32>
    %6 = vector.multi_reduction <add>, %5, %cst_1 [1] : vector<16x32xf32> to vector<16xf32>
    %7 = vector.shape_cast %6 : vector<16xf32> to vector<16x1xf32>
    %8 = vector.broadcast %7 : vector<16x1xf32> to vector<16x32xf32>
    %9 = arith.divf %5, %8 : vector<16x32xf32>
    %c0_2 = arith.constant 0 : index
    %c0_3 = arith.constant 0 : index
    %10 = vector.load %arg2[%c0_2, %c0_3] : memref<32x128xf32, #tpu.memory_space<vmem>>, vector<32x128xf32>
    %cst_4 = arith.constant dense<0.000000e+00> : vector<16x128xf32>
    %11 = tpu.matmul %9, %10, %cst_4 {dimension_numbers = #tpu.dot_dimension_numbers<[1], [0], [0], [1], [0, 0, 1, 1], [], []>} : vector<16x32xf32>, vector<32x128xf32>, vector<16x128xf32> -> vector<16x128xf32>
    %c0_5 = arith.constant 0 : index
    %c0_6 = arith.constant 0 : index
    %12 = vector.load %arg3[%c0_5, %c0_6] : memref<16x2xf32, #tpu.memory_space<vmem>>, vector<16x1xf32>
    %c0_7 = arith.constant 0 : index
    %c1 = arith.constant 1 : index
    %13 = vector.load %arg3[%c0_7, %c1] : memref<16x2xf32, #tpu.memory_space<vmem>>, vector<16x1xf32>
    %c0_8 = arith.constant 0 : index
    %c0_9 = arith.constant 0 : index
    %14 = vector.load %arg4[%c0_8, %c0_9] : memref<2x128xf32, #tpu.memory_space<vmem>>, vector<1x128xf32>
    %c1_10 = arith.constant 1 : index
    %c0_11 = arith.constant 0 : index
    %15 = vector.load %arg4[%c1_10, %c0_11] : memref<2x128xf32, #tpu.memory_space<vmem>>, vector<1x128xf32>
    %16 = vector.broadcast %12 : vector<16x1xf32> to vector<16x128xf32>
    %17 = vector.broadcast %14 : vector<1x128xf32> to vector<16x128xf32>
    %18 = arith.subf %16, %17 : vector<16x128xf32>
    %19 = math.absf %18 : vector<16x128xf32>
    %20 = vector.broadcast %13 : vector<16x1xf32> to vector<16x128xf32>
    %21 = vector.broadcast %15 : vector<1x128xf32> to vector<16x128xf32>
    %22 = arith.subf %20, %21 : vector<16x128xf32>
    %23 = math.absf %22 : vector<16x128xf32>
    %24 = arith.addf %19, %23 : vector<16x128xf32>
    %cst_12 = arith.constant 1.000000e+00 : f32
    %25 = vector.broadcast %cst_12 : f32 to vector<16x128xf32>
    %26 = arith.mulf %25, %24 : vector<16x128xf32>
    %27 = arith.addf %11, %26 : vector<16x128xf32>
    %28 = vector.broadcast %13 : vector<16x1xf32> to vector<16x128xf32>
    %29 = vector.broadcast %15 : vector<1x128xf32> to vector<16x128xf32>
    %30 = arith.minimumf %28, %29 : vector<16x128xf32>
    %31 = vector.broadcast %12 : vector<16x1xf32> to vector<16x128xf32>
    %32 = vector.broadcast %14 : vector<1x128xf32> to vector<16x128xf32>
    %33 = arith.maximumf %31, %32 : vector<16x128xf32>
    %34 = arith.subf %30, %33 : vector<16x128xf32>
    %cst_13 = arith.constant 0.000000e+00 : f32
    %35 = vector.broadcast %cst_13 : f32 to vector<16x128xf32>
    %36 = arith.maximumf %34, %35 : vector<16x128xf32>
    %37 = arith.subf %13, %12 : vector<16x1xf32>
    %38 = arith.subf %15, %14 : vector<1x128xf32>
    %39 = vector.broadcast %37 : vector<16x1xf32> to vector<16x128xf32>
    %40 = vector.broadcast %38 : vector<1x128xf32> to vector<16x128xf32>
    %41 = arith.addf %39, %40 : vector<16x128xf32>
    %42 = arith.subf %41, %36 : vector<16x128xf32>
    %cst_14 = arith.constant 9.99999997E-7 : f32
    %43 = vector.broadcast %cst_14 : f32 to vector<16x128xf32>
    %44 = arith.addf %42, %43 : vector<16x128xf32>
    %45 = arith.divf %36, %44 : vector<16x128xf32>
    %46 = vector.broadcast %13 : vector<16x1xf32> to vector<16x128xf32>
    %47 = vector.broadcast %15 : vector<1x128xf32> to vector<16x128xf32>
    %48 = arith.maximumf %46, %47 : vector<16x128xf32>
    %49 = vector.broadcast %12 : vector<16x1xf32> to vector<16x128xf32>
    %50 = vector.broadcast %14 : vector<1x128xf32> to vector<16x128xf32>
    %51 = arith.minimumf %49, %50 : vector<16x128xf32>
    %52 = arith.subf %48, %51 : vector<16x128xf32>
    %53 = arith.subf %52, %42 : vector<16x128xf32>
    %cst_15 = arith.constant 9.99999997E-7 : f32
    %54 = vector.broadcast %cst_15 : f32 to vector<16x128xf32>
    %55 = arith.addf %52, %54 : vector<16x128xf32>
    %56 = arith.divf %53, %55 : vector<16x128xf32>
    %57 = arith.subf %45, %56 : vector<16x128xf32>
    %cst_16 = arith.constant 1.000000e+00 : f32
    %58 = vector.broadcast %cst_16 : f32 to vector<16x128xf32>
    %59 = arith.mulf %58, %57 : vector<16x128xf32>
    %60 = arith.subf %27, %59 : vector<16x128xf32>
    %c0_17 = arith.constant 0 : index
    %c0_18 = arith.constant 0 : index
    %61 = vector.load %arg5[%c0_17, %c0_18] : memref<16x128xf32, #tpu.memory_space<vmem>>, vector<16x128xf32>
    tpu.vector_store %arg5[%c0_17, %c0_18], %60 {strides = array<i32>} : memref<16x128xf32, #tpu.memory_space<vmem>>, vector<16x128xf32>,
    return
  }
  func.func @transform_0(%arg0: i32) -> (i32, i32) {
    %c0_i32 = arith.constant 0 : i32
    %c0_i32_0 = arith.constant 0 : i32
    return %arg0, %c0_i32 : i32, i32
  }
  func.func @transform_1(%arg0: i32) -> (i32, i32) {
    %c0_i32 = arith.constant 0 : i32
    %c0_i32_0 = arith.constant 0 : i32
    %c0_i32_1 = arith.constant 0 : i32
    return %c0_i32, %c0_i32_0 : i32, i32
  }
  func.func @transform_2(%arg0: i32) -> (i32, i32) {
    %c0_i32 = arith.constant 0 : i32
    %c0_i32_0 = arith.constant 0 : i32
    return %arg0, %c0_i32 : i32, i32
  }
  func.func @transform_3(%arg0: i32) -> (i32, i32) {
    %c0_i32 = arith.constant 0 : i32
    %c0_i32_0 = arith.constant 0 : i32
    %c0_i32_1 = arith.constant 0 : i32
    return %c0_i32, %c0_i32_0 : i32, i32
  }
  func.func @transform_4(%arg0: i32) -> (i32, i32) {
    %c0_i32 = arith.constant 0 : i32
    %c0_i32_0 = arith.constant 0 : i32
    return %arg0, %c0_i32 : i32, i32
  }
}

</mosaic_0001>

<llo_original>
// kernel: compute_cost_matrix.1
$region0: #{compute_cost_matrix.1}
  #allocation0 [shape = 'u32[]', space=smem, size = 0x4, offset = 0x4, fixed_abs, tag = 'smem constant byte address 0x4 - core index']
  #allocation1 [shape = 'u32[144,128]{1,0:T(1,128)}', space=vmem, size = 0x12000, scoped, tag = 'internal scratch']
  %s0 = inlined_call_operand.vmem [shape: f32[16,32], index: 0, kind: input, shape index: {}]
  %s1 = inlined_call_operand.vmem [shape: f32[32,128], index: 1, kind: input, shape index: {}]
  %s2 = inlined_call_operand.vmem [shape: f32[16,2], index: 2, kind: input, shape index: {}]
  %s3 = inlined_call_operand.vmem [shape: f32[2,128], index: 3, kind: input, shape index: {}]
  %s4 = inlined_call_operand.vmem [shape: f32[16,128], index: 4, kind: output, shape index: {}]
  %s5 = sld [smem:[#allocation0]]
  $region26: #{compute_cost_matrix.1} parent=0
    _
  %s7 = ssub.s32 1, %s5
  %s8 = scalar_select 0, %s7, %s5
  // Predicated region
  $region2: #{compute_cost_matrix.1} parent=0 // pred_check
    _
  $region3: #{compute_cost_matrix.1} parent=0 // pred_check_branch
    %10 = sbr.rel (0) target = $region5
  $region4: #{compute_cost_matrix.1} parent=0 // pred_region
    _
  $region5: #{compute_cost_matrix.1} parent=0 // pred_fallthru
    _
  // Predicated region
  $region6: #{compute_cost_matrix.1} parent=0 // pred_check
    _
  $region7: #{compute_cost_matrix.1} parent=0 // pred_check_branch
    %12 = sbr.rel (0) target = $region9
  $region8: #{compute_cost_matrix.1} parent=0 // pred_region
    _
  $region9: #{compute_cost_matrix.1} parent=0 // pred_fallthru
    _
  // Predicated region
  $region10: #{compute_cost_matrix.1} parent=0 // pred_check
    _
  $region11: #{compute_cost_matrix.1} parent=0 // pred_check_branch
    %14 = sbr.rel (0) target = $region13
  $region12: #{compute_cost_matrix.1} parent=0 // pred_region
    _
  $region13: #{compute_cost_matrix.1} parent=0 // pred_fallthru
    _
  // Predicated region
  $region14: #{compute_cost_matrix.1} parent=0 // pred_check
    _
  $region15: #{compute_cost_matrix.1} parent=0 // pred_check_branch
    %16 = sbr.rel (0) target = $region17
  $region16: #{compute_cost_matrix.1} parent=0 // pred_region
    _
  $region17: #{compute_cost_matrix.1} parent=0 // pred_fallthru
    _
  %v17 = vld [vmem:[%s0] sm:$0xff]
  %v18 = vld [vmem:[%s0 + $0x8] sm:$0xff]
  %vm19 = vcmask 261120
  %v20 = vsel %vm19, %v17, -inf
  %21 = vmax.xlane.f32.xlu0 %v20
  %v22 = vpop.xlane.xlu0 %21
  %v23 = vsel %vm19, %v18, -inf
  %24 = vmax.xlane.f32.xlu0 %v23
  %v25 = vpop.xlane.xlu0 %24
  %v26 = vsub.f32 %v17, %v22
  %v27 = vsub.f32 %v18, %v25
  %v28 = vmul.f32 %v26, 1.442695
  %v29 = vpow.pop %v28
  %v30 = vmul.f32 %v27, 1.442695
  %v31 = vpow.pop %v30
  %v32 = vsel %vm19, %v29, 0.0
  %33 = vadd.xlane.f32.xlu0 %v32
  %v34 = vpop.xlane.xlu0 %33
  %v35 = vsel %vm19, %v31, 0.0
  %36 = vadd.xlane.f32.xlu0 %v35
  %v37 = vpop.xlane.xlu0 %36
  %v38 = vrcp.pop %v34
  %v39 = vmul.f32 %v29, %v38
  %v40 = vrcp.pop %v37
  %v41 = vmul.f32 %v31, %v40
  %v42 = vld [vmem:[%s1] sm:$0xff]
  %v43 = vld [vmem:[%s1 + $0x8] sm:$0xff]
  %v44 = vld [vmem:[%s1 + $0x10] sm:$0xff]
  %v45 = vld [vmem:[%s1 + $0x18] sm:$0xff]
  %v46 = vld [vmem:[%s2] sm:$0xff]
  %v47 = vld [vmem:[%s2 + $0x8] sm:$0xff]
  %v48 = vld [vmem:[%s3] sm:$0x1]
  %v49 = vld [vmem:[%s3 + $0x1] sm:$0x1]
  %51 = vset.pattern.permute.xlu0 0
  %52 = vperm.xlu0 %51, %v46
  %v53 = vpop.permute.xlu0 %52
  %56 = vset.pattern.permute.xlu0 0
  %57 = vperm.xlu0 %56, %v47
  %v58 = vpop.permute.xlu0 %57
  %v60 = vlaneseq
  %v61 = vshrl.u32 %v60, 7
  %v62 = vsub.s32 0, %v61
  %v63 = vrot.slane %v48, %v62
  %v64 = vsub.f32 %v53, %v63
  %v65 = vsub.f32 %v58, %v63
  %v66 = vand.u32 2147483647, %v64
  %v67 = vand.u32 2147483647, %v65
  %68 = vset.pattern.permute.xlu0 1
  %69 = vperm.xlu0 %68, %v46
  %v70 = vpop.permute.xlu0 %69
  %72 = vset.pattern.permute.xlu0 1
  %73 = vperm.xlu0 %72, %v47
  %v74 = vpop.permute.xlu0 %73
  %v76 = vlaneseq
  %v77 = vshrl.u32 %v76, 7
  %v78 = vsub.s32 0, %v77
  %v79 = vrot.slane %v49, %v78
  %v80 = vsub.f32 %v70, %v79
  %v81 = vsub.f32 %v74, %v79
  %v82 = vand.u32 2147483647, %v80
  %v83 = vand.u32 2147483647, %v81
  %v84 = vadd.f32 %v66, %v82
  %v85 = vadd.f32 %v67, %v83
  %v87 = vsel %vm19, %v39, 0
  %v90 = vsel %vm19, %v41, 0
  %92 = vmatprep.subr.mxu0 0.0
  %93 = vmatpush1.msra.mxu0 %v42
  %94 = vmatprep.subr.mxu0 0.0
  %95 = vmatpush1.msra.mxu0 %v43
  %96 = vmatprep.subr.mxu0 0.0
  %97 = vmatpush1.msra.mxu0 %v44
  %98 = vmatprep.subr.mxu0 0.0
  %99 = vmatpush1.msra.mxu0 %v45
  %100 = vmatprep.subr.mxu0 0.0
  %101 = vmatpush1.msra.mxu0 0.0
  %102 = vmatprep.subr.mxu0 0.0
  %103 = vmatpush1.msra.mxu0 0.0
  %104 = vmatprep.subr.mxu0 0.0
  %105 = vmatpush1.msra.mxu0 0.0
  %106 = vmatprep.subr.mxu0 0.0
  %107 = vmatpush1.msra.mxu0 0.0
  %108 = vmatprep.subr.mxu0 0.0
  %109 = vmatpush1.msra.mxu0 0.0
  %110 = vmatprep.subr.mxu0 0.0
  %111 = vmatpush1.msra.mxu0 0.0
  %112 = vmatprep.subr.mxu0 0.0
  %113 = vmatpush1.msra.mxu0 0.0
  %114 = vmatprep.subr.mxu0 0.0
  %115 = vmatpush1.msra.mxu0 0.0
  %116 = vmatprep.subr.mxu0 0.0
  %117 = vmatpush1.msra.mxu0 0.0
  %118 = vmatprep.subr.mxu0 0.0
  %119 = vmatpush1.msra.mxu0 0.0
  %120 = vmatprep.subr.mxu0 0.0
  %121 = vmatpush1.msra.mxu0 0.0
  %122 = vmatprep.subr.mxu0 0.0
  %123 = vmatpush1.msra.mxu0 0.0
  %124 = vmatprep.subr.mxu0 0.0
  %125 = vmatpush1.msra.mxu0 0.0
  %126 = vmatprep.subr.mxu0 0.0
  %127 = vmatpush1.msra.mxu0 0.0
  %128 = vmatprep.subr.mxu0 0.0
  %129 = vmatpush1.msra.mxu0 0.0
  %130 = vmatprep.subr.mxu0 0.0
  %131 = vmatpush1.msra.mxu0 0.0
  %132 = vmatprep.subr.mxu0 0.0
  %133 = vmatpush1.msra.mxu0 0.0
  %134 = vmatprep.subr.mxu0 0.0
  %135 = vmatpush1.msra.mxu0 0.0
  %136 = vmatprep.subr.mxu0 0.0
  %137 = vmatpush1.msra.mxu0 0.0
  %138 = vmatprep.subr.mxu0 0.0
  %139 = vmatpush1.msra.mxu0 0.0
  %140 = vmatprep.subr.mxu0 0.0
  %141 = vmatpush1.msra.mxu0 0.0
  %142 = vmatprep.subr.mxu0 0.0
  %143 = vmatpush1.msra.mxu0 0.0
  %144 = vmatprep.subr.mxu0 0.0
  %145 = vmatpush1.msra.mxu0 0.0
  %146 = vmatprep.subr.mxu0 0.0
  %147 = vmatpush1.msra.mxu0 0.0
  %148 = vmatprep.subr.mxu0 0.0
  %149 = vmatpush1.msra.mxu0 0.0
  %150 = vmatprep.subr.mxu0 0.0
  %151 = vmatpush1.msra.mxu0 0.0
  %152 = vmatprep.subr.mxu0 0.0
  %153 = vmatpush1.msra.mxu0 0.0
  %154 = vmatprep.subr.mxu0 0.0
  %155 = vmatpush1.msra.mxu0 0.0
  %156 = vmatprep.mubr.f32.mxu0 0.0
  %157 = vmatmul.mubr.f32.gmra.mrb[0].mxu0 %v87
  %v158 = vpop.f32.mrb[0].mxu0
  %v159 = vadd.f32 %v84, %v158
  %v160 = vpop.f32.mrb[0].mxu0
  %161 = vmatprep.mubr.f32.mxu0 0.0
  %162 = vmatmul.mubr.f32.gmra.mrb[0].mxu0 %v90
  %v163 = vpop.f32.mrb[0].mxu0
  %v164 = vadd.f32 %v85, %v163
  %v165 = vpop.f32.mrb[0].mxu0
  %166 = vdwg.mxu0
  %v167 = vmin.f32 %v70, %v79
  %v168 = vmin.f32 %v74, %v79
  %v169 = vmax.f32 %v53, %v63
  %v170 = vmax.f32 %v58, %v63
  %v171 = vsub.f32 %v167, %v169
  %v172 = vsub.f32 %v168, %v170
  %v173 = vmax.f32 %v171, 0.0
  %v174 = vmax.f32 %v172, 0.0
  %175 = vrot.lane.b32.xlu0 %v46, 1
  %v176 = vpop.permute.xlu0 %175
  %177 = vrot.lane.b32.xlu0 %v47, 1
  %v178 = vpop.permute.xlu0 %177
  %v181 = vsub.f32 %v46, %v176
  %v182 = vsub.f32 %v47, %v178
  %v183 = vsub.f32 %v49, %v48
  %185 = vset.pattern.permute.xlu0 1
  %186 = vperm.xlu0 %185, %v181
  %v187 = vpop.permute.xlu0 %186
  %190 = vset.pattern.permute.xlu0 1
  %191 = vperm.xlu0 %190, %v182
  %v192 = vpop.permute.xlu0 %191
  %v194 = vlaneseq
  %v195 = vshrl.u32 %v194, 7
  %v196 = vsub.s32 0, %v195
  %v197 = vrot.slane %v183, %v196
  %v198 = vadd.f32 %v187, %v197
  %v199 = vadd.f32 %v192, %v197
  %v200 = vsub.f32 %v198, %v173
  %v201 = vsub.f32 %v199, %v174
  %v202 = vadd.f32 %v200, 1e-06
  %v203 = vadd.f32 %v201, 1e-06
  %v204 = vrcp.pop %v202
  %v205 = vmul.f32 %v173, %v204
  %v206 = vrcp.pop %v203
  %v207 = vmul.f32 %v174, %v206
  %v208 = vmax.f32 %v70, %v79
  %v209 = vmax.f32 %v74, %v79
  %v210 = vmin.f32 %v53, %v63
  %v211 = vmin.f32 %v58, %v63
  %v212 = vsub.f32 %v208, %v210
  %v213 = vsub.f32 %v209, %v211
  %v214 = vsub.f32 %v212, %v200
  %v215 = vsub.f32 %v213, %v201
  %v216 = vadd.f32 %v212, 1e-06
  %v217 = vadd.f32 %v213, 1e-06
  %v218 = vrcp.pop %v216
  %v219 = vmul.f32 %v214, %v218
  %v220 = vrcp.pop %v217
  %v221 = vmul.f32 %v215, %v220
  %v222 = vsub.f32 %v205, %v219
  %v223 = vsub.f32 %v207, %v221
  %v224 = vsub.f32 %v159, %v222
  %v225 = vsub.f32 %v164, %v223
  %226 = vst [vmem:[%s4] sm:$0xff] %v224
  %227 = vst [vmem:[%s4 + $0x8] sm:$0xff] %v225
  // Predicated region
  $region18: #{compute_cost_matrix.1} parent=0 // pred_check
    _
  $region19: #{compute_cost_matrix.1} parent=0 // pred_check_branch
    %229 = sbr.rel (0) target = $region21
  $region20: #{compute_cost_matrix.1} parent=0 // pred_region
    _
  $region21: #{compute_cost_matrix.1} parent=0 // pred_fallthru
    _
  // Predicated region
  $region22: #{compute_cost_matrix.1} parent=0 // pred_check
    _
  $region23: #{compute_cost_matrix.1} parent=0 // pred_check_branch
    %231 = sbr.rel (0) target = $region25
  $region24: #{compute_cost_matrix.1} parent=0 // pred_region
    _
  $region25: #{compute_cost_matrix.1} parent=0 // pred_fallthru
    _

</llo_original>
